<compile_context>
chip_gen: v5e
topology: v5e:2x2
jax: 0.10.0
libtpu: 0.0.40
codegen_flags: <defaults>
</compile_context>

<pallas_src>
import functools

import jax
import jax.numpy as jnp
import numpy as np
from jax.experimental import pallas as pl
from jax.experimental.pallas import tpu as pltpu


def _round_up(x, m):
    return ((x + m - 1) // m) * m


# ---------------------------------------------------------------------------
# Kernel
# ---------------------------------------------------------------------------
def _lstm_tele_kernel(in_ref, w_ref, b_ref, out_ref, *,
                      input_dim, hidden_dim, out_dim):
    H = hidden_dim
    out2 = out_dim * out_dim
    in_pad = in_ref.shape[1]                    # padded width of input row
    mxu = w_ref.dtype                           # f32 (default) or bf16

    state_block = _round_up(4 * H, 128)
    head_block = out_ref.shape[1] - state_block
    head_pad = head_block - (out2 + 2)
    state_pad = state_block - 4 * H

    row = in_ref[...]                           # (1, in_pad)  f32
    c0 = row[:, input_dim + 2 * H:input_dim + 3 * H]
    c1 = row[:, input_dim + 3 * H:input_dim + 4 * H]

    # --- mm_A: everything that depends only on kernel inputs -----------------
    #   cols 0:4H   -> cell-1 gates   (x @ W_ih1^T + h0 @ W_hh1^T + b1)
    #   cols 4H:8H  -> cell-2 "pre"   (h1_old @ W_hh2^T + b2)
    res_a = jnp.dot(row.astype(mxu), w_ref[0:in_pad, :],
                    preferred_element_type=jnp.float32) + b_ref[0:1, :]
    gates1 = res_a[:, 0:4 * H]
    gates2_pre = res_a[:, 4 * H:8 * H]

    # cell 1 activations (PyTorch gate order i, f, g, o), all in f32
    sig1 = jax.nn.sigmoid(gates1)
    tah1 = jnp.tanh(gates1)
    c0n = sig1[:, H:2 * H] * c0 + sig1[:, 0:H] * tah1[:, 2 * H:3 * H]
    h0n = sig1[:, 3 * H:4 * H] * jnp.tanh(c0n)

    # --- mm_B: everything that depends only on h0' ---------------------------
    #   cols 0:4H -> cell-2 ih half (h0' @ W_ih2^T)   col 4H -> linear3(h0')
    res_b = jnp.dot(h0n.astype(mxu), w_ref[in_pad:in_pad + H, :],
                    preferred_element_type=jnp.float32) + b_ref[1:2, :]
    gates2 = gates2_pre + res_b[:, 0:4 * H]
    lin3 = res_b[:, 4 * H:4 * H + 1]

    # cell 2 activations
    sig2 = jax.nn.sigmoid(gates2)
    tah2 = jnp.tanh(gates2)
    c1n = sig2[:, H:2 * H] * c1 + sig2[:, 0:H] * tah2[:, 2 * H:3 * H]
    h1n = sig2[:, 3 * H:4 * H] * jnp.tanh(c1n)

    # --- mm_C: heads on h1' ---------------------------------------------------
    #   cols 0:out2 -> linear1(h1')    col out2 -> linear2(h1')
    res_c = jnp.dot(h1n.astype(mxu), w_ref[in_pad + H:in_pad + 2 * H, :],
                    preferred_element_type=jnp.float32) + b_ref[2:3, :]
    g_flat = res_c[:, 0:out2]
    step_size = jnp.clip(res_c[:, out2:out2 + 1], 1e-7, 0.005)
    m_c = jnp.clip(2.0 * jnp.clip(lin3, 0.0, 1.0), 0.0, 1.0)

    # single lane-dense (1, head_block + state_block) store -> one output DMA
    pieces = [g_flat, step_size, m_c]
    if head_pad:
        pieces.append(jnp.zeros((1, head_pad), jnp.float32))
    pieces += [h0n, h1n, c0n, c1n]              # same order as input state
    if state_pad:
        pieces.append(jnp.zeros((1, state_pad), jnp.float32))
    out_ref[...] = jnp.concatenate(pieces, axis=1)


# ---------------------------------------------------------------------------
# One-time parameter packing (hoisted out of the per-step call path)
# ---------------------------------------------------------------------------
def pack_params(params, input_dim, hidden_dim, out_dim, mxu_dtype=jnp.float32):
    """Pack all weights into one (in_pad + 2H, cols) slab and all biases into
    one (3, cols) slab, laid out for the 3-matmul kernel above."""
    H = hidden_dim
    out2 = out_dim * out_dim
    in_pad = _round_up(input_dim + 4 * H, 128)
    cols = _round_up(8 * H, 128)
    # guard against a future shape change silently reading padded columns
    assert cols >= 4 * H + 1, "lin3 column does not fit in weight slab"
    assert cols >= out2 + 2, "linear1/linear2 columns do not fit in weight slab"
    f32 = jnp.float32

    # mm_A weights: rows follow packed-input layout [x | h0 | h1 | c0 | c1 | 0]
    w_a = jnp.zeros((in_pad, cols), f32)
    w_a = w_a.at[0:input_dim, 0:4 * H].set(params["w_ih1"].T.astype(f32))
    w_a = w_a.at[input_dim:input_dim + H, 0:4 * H].set(params["w_hh1"].T.astype(f32))
    w_a = w_a.at[input_dim + H:input_dim + 2 * H, 4 * H:8 * H].set(
        params["w_hh2"].T.astype(f32))

    # mm_B weights: cell-2 ih half + linear3
    w_b = jnp.zeros((H, cols), f32)
    w_b = w_b.at[:, 0:4 * H].set(params["w_ih2"].T.astype(f32))
    w_b = w_b.at[:, 4 * H].set(params["w_lin3"][0].astype(f32))

    # mm_C weights: linear1 + linear2
    w_c = jnp.zeros((H, cols), f32)
    w_c = w_c.at[:, 0:out2].set(params["w_lin1"].T.astype(f32))
    w_c = w_c.at[:, out2].set(params["w_lin2"][0].astype(f32))

    w_slab = jnp.concatenate([w_a, w_b, w_c], axis=0).astype(mxu_dtype)

    # biases stay f32 (added after the f32-accumulated matmuls)
    b_a = jnp.zeros((1, cols), f32)
    b_a = b_a.at[0, 0:4 * H].set((params["b_ih1"] + params["b_hh1"]).astype(f32))
    b_a = b_a.at[0, 4 * H:8 * H].set((params["b_ih2"] + params["b_hh2"]).astype(f32))
    b_b = jnp.zeros((1, cols), f32)
    b_b = b_b.at[0, 4 * H].set(params["b_lin3"][0].astype(f32))
    b_c = jnp.zeros((1, cols), f32)
    b_c = b_c.at[0, 0:out2].set(params["b_lin1"].astype(f32))
    b_c = b_c.at[0, out2].set(params["b_lin2"][0].astype(f32))
    b_slab = jnp.concatenate([b_a, b_b, b_c], axis=0)          # (3, cols)
    return w_slab, b_slab


# ---------------------------------------------------------------------------
# Hot-path step: packed state in, packed state out (no reshapes / stacks)
# ---------------------------------------------------------------------------
def lstm_tele_lr_step_packed(x_row, state_packed, w_slab, b_slab, *,
                             input_dim, hidden_dim, out_dim):
    """x_row: (1, input_dim) f32; state_packed: (1, 4H) = [h0 | h1 | c0 | c1].
    Returns (g, step_size, m_c, new_state_packed)."""
    H = hidden_dim
    out2 = out_dim * out_dim
    in_pad = _round_up(input_dim + 4 * H, 128)
    head_block = _round_up(out2 + 2, 128)
    state_block = _round_up(4 * H, 128)
    out_cols = head_block + state_block

    pad = in_pad - (input_dim + 4 * H)
    pieces = [x_row.astype(jnp.float32), state_packed.astype(jnp.float32)]
    if pad:
        pieces.append(jnp.zeros((1, pad), jnp.float32))
    in_row = jnp.concatenate(pieces, axis=1)                    # (1, in_pad)

    kernel = functools.partial(_lstm_tele_kernel, input_dim=input_dim,
                               hidden_dim=H, out_dim=out_dim)
    cols = w_slab.shape[1]
    flops = 2 * (in_pad + 2 * H) * cols                         # 3 fused matmuls
    bytes_accessed = (int(w_slab.size) * w_slab.dtype.itemsize
                      + int(b_slab.size) * 4 + in_pad * 4 + out_cols * 4)
    vmem = pl.BlockSpec(memory_space=pltpu.VMEM)

    packed = pl.pallas_call(
        kernel,
        out_shape=jax.ShapeDtypeStruct((1, out_cols), jnp.float32),
        in_specs=[vmem, vmem, vmem],
        out_specs=vmem,
        cost_estimate=pl.CostEstimate(flops=flops, transcendentals=18 * H,
                                      bytes_accessed=bytes_accessed),
    )(in_row, w_slab, b_slab)

    g = packed[0, 0:out2].reshape(out_dim, out_dim)
    step_size = packed[:, out2:out2 + 1]                        # (1, 1)
    m_c = packed[:, out2 + 1:out2 + 2]                          # (1, 1)
    new_state = packed[:, head_block:head_block + 4 * H]        # (1, 4H)
    return g, step_size, m_c, new_state


# ---------------------------------------------------------------------------
# Spec-compatible wrapper (unpacks state only for external consumers)
# ---------------------------------------------------------------------------
def lstm_tele_lr_forward(dL_dU, dL_dV, hidden, cell, w_slab, b_slab, *,
                         input_dim, hidden_dim, out_dim):
    H = hidden_dim
    # spec-mandated flatten + cat of the two layer gradients
    x = jnp.concatenate([dL_dU.reshape(-1), dL_dV.reshape(-1)])[None, :]
    state = jnp.concatenate([hidden[0], hidden[1], cell[0], cell[1]], axis=1)
    g, step_size, m_c, new_state = lstm_tele_lr_step_packed(
        x, state, w_slab, b_slab,
        input_dim=input_dim, hidden_dim=H, out_dim=out_dim)
    h0n = new_state[:, 0:H]
    h1n = new_state[:, H:2 * H]
    c0n = new_state[:, 2 * H:3 * H]
    c1n = new_state[:, 3 * H:4 * H]
    hidden_out = jnp.stack([h0n, h1n])          # (2, 1, H)
    cell_out = jnp.stack([c0n, c1n])            # (2, 1, H)
    return g, step_size, m_c, hidden_out, cell_out


# ---------------------------------------------------------------------------
# Deterministic init + float64 numpy reference (for correctness check)
# ---------------------------------------------------------------------------
def _init_params(key, input_dim, hidden_dim, out_dim):
    H = hidden_dim
    out2 = out_dim * out_dim
    ks = jax.random.split(key, 14)
    bound = 1.0 / float(np.sqrt(H))

    def u(k, shape):
        return jax.random.uniform(k, shape, jnp.float32, -bound, bound)

    return {
        "w_ih1": u(ks[0], (4 * H, input_dim)),
        "w_hh1": u(ks[1], (4 * H, H)),
        "b_ih1": u(ks[2], (4 * H,)),
        "b_hh1": u(ks[3], (4 * H,)),
        "w_ih2": u(ks[4], (4 * H, H)),
        "w_hh2": u(ks[5], (4 * H, H)),
        "b_ih2": u(ks[6], (4 * H,)),
        "b_hh2": u(ks[7], (4 * H,)),
        "w_lin1": u(ks[8], (out2, H)),
        "b_lin1": u(ks[9], (out2,)),
        "w_lin2": u(ks[10], (1, H)),
        "b_lin2": u(ks[11], (1,)),
        "w_lin3": u(ks[12], (1, H)),
        "b_lin3": u(ks[13], (1,)),
    }


def _reference_numpy(dL_dU, dL_dV, hidden, cell, params, out_dim):
    p = {k: np.asarray(v, np.float64) for k, v in params.items()}
    x = np.concatenate([np.asarray(dL_dU, np.float64).reshape(-1),
                        np.asarray(dL_dV, np.float64).reshape(-1)])[None, :]
    hid = np.asarray(hidden, np.float64)
    cel = np.asarray(cell, np.float64)

    def sigmoid(v):
        return 1.0 / (1.0 + np.exp(-v))

    def lstm_cell(xx, h, c, w_ih, w_hh, b_ih, b_hh):
        H = h.shape[1]
        gates = xx @ w_ih.T + h @ w_hh.T + b_ih + b_hh
        i = sigmoid(gates[:, 0:H])
        f = sigmoid(gates[:, H:2 * H])
        g = np.tanh(gates[:, 2 * H:3 * H])
        o = sigmoid(gates[:, 3 * H:4 * H])
        c_new = f * c + i * g
        h_new = o * np.tanh(c_new)
        return h_new, c_new

    h0, c0 = lstm_cell(x, hid[0], cel[0], p["w_ih1"], p["w_hh1"],
                       p["b_ih1"], p["b_hh1"])
    h1, c1 = lstm_cell(h0, hid[1], cel[1], p["w_ih2"], p["w_hh2"],
                       p["b_ih2"], p["b_hh2"])
    g = (h1 @ p["w_lin1"].T + p["b_lin1"]).reshape(out_dim, out_dim)
    step = np.clip(h1 @ p["w_lin2"].T + p["b_lin2"], 1e-7, 0.005)
    m_c = np.clip(2.0 * np.clip(h0 @ p["w_lin3"].T + p["b_lin3"], 0.0, 1.0),
                  0.0, 1.0)
    return g, step, m_c, np.stack([h0, h1]), np.stack([c0, c1])


# ---------------------------------------------------------------------------
if __name__ == "__main__":
    U_SHAPE = (4, 8)                       # dL_dU
    V_SHAPE = (4, 8)                       # dL_dV
    INPUT_DIM = U_SHAPE[0] * U_SHAPE[1] + V_SHAPE[0] * V_SHAPE[1]   # 64
    HIDDEN = 32
    OUT_DIM = 8                            # linear1 -> out_dim^2 = 64

    key = jax.random.PRNGKey(0)
    k_param, k_u, k_v, k_h, k_c = jax.random.split(key, 5)
    params = _init_params(k_param, INPUT_DIM, HIDDEN, OUT_DIM)

    dL_dU = jax.random.normal(k_u, U_SHAPE, jnp.float32)
    dL_dV = jax.random.normal(k_v, V_SHAPE, jnp.float32)
    hidden = jax.random.normal(k_h, (2, 1, HIDDEN), jnp.float32)
    cell = jax.random.normal(k_c, (2, 1, HIDDEN), jnp.float32)

    # one-time weight packing, hoisted out of the per-step hot path.
    # (For v6e/v7x pass mxu_dtype=jnp.bfloat16 to halve weight traffic and use
    #  the bf16-native MXU; default f32 keeps the 5e-3 tolerance check exact.)
    w_slab, b_slab = jax.block_until_ready(
        pack_params(params, INPUT_DIM, HIDDEN, OUT_DIM, mxu_dtype=jnp.float32))

    fwd = jax.jit(functools.partial(lstm_tele_lr_forward,
                                    input_dim=INPUT_DIM,
                                    hidden_dim=HIDDEN,
                                    out_dim=OUT_DIM))
    outs = jax.block_until_ready(fwd(dL_dU, dL_dV, hidden, cell, w_slab, b_slab))
    g, step_size, m_c, hidden_out, cell_out = outs

    assert g.shape == (OUT_DIM, OUT_DIM)
    assert step_size.shape == (1, 1)
    assert m_c.shape == (1, 1)
    assert hidden_out.shape == (2, 1, HIDDEN)
    assert cell_out.shape == (2, 1, HIDDEN)

    # correctness check against float64 numpy reference of the torch math
    ref = _reference_numpy(dL_dU, dL_dV, hidden, cell, params, OUT_DIM)
    for got, want in zip(outs, ref):
        np.testing.assert_allclose(np.asarray(got), want, rtol=5e-3, atol=5e-3)

    # also exercise the packed-state hot path (what a training loop would chain)
    x_row = jnp.concatenate([dL_dU.reshape(-1), dL_dV.reshape(-1)])[None, :]
    state0 = jnp.concatenate([hidden[0], hidden[1], cell[0], cell[1]], axis=1)
    step_fn = jax.jit(functools.partial(lstm_tele_lr_step_packed,
                                        input_dim=INPUT_DIM,
                                        hidden_dim=HIDDEN,
                                        out_dim=OUT_DIM))
    g2, _, _, new_state = jax.block_until_ready(
        step_fn(x_row, state0, w_slab, b_slab))
    np.testing.assert_allclose(np.asarray(g2), np.asarray(g), rtol=1e-6, atol=1e-6)
    assert new_state.shape == (1, 4 * HIDDEN)

    print("KERNEL_OK")
</pallas_src>

<mosaic_0001>
module attributes {stable_mosaic.version = 11 : i64} {
  func.func @_lstm_tele_kernel(%arg0: memref<1x256xf32, #tpu.memory_space<vmem>>, %arg1: memref<320x256xf32, #tpu.memory_space<vmem>>, %arg2: memref<3x256xf32, #tpu.memory_space<vmem>>, %arg3: memref<1x256xf32, #tpu.memory_space<vmem>>) attributes {dimension_semantics = [], scalar_prefetch = 0 : i64, scratch_operands = 0 : i64, tpu.core_type = #tpu.core_type<tc>} {
    %c0 = arith.constant 0 : index
    %c0_0 = arith.constant 0 : index
    %0 = vector.load %arg0[%c0, %c0_0] : memref<1x256xf32, #tpu.memory_space<vmem>>, vector<1x256xf32>
    %1 = vector.extract_strided_slice %0 {offsets = [0, 128], sizes = [1, 32], strides = [1, 1]} : vector<1x256xf32> to vector<1x32xf32>
    %2 = vector.extract_strided_slice %0 {offsets = [0, 160], sizes = [1, 32], strides = [1, 1]} : vector<1x256xf32> to vector<1x32xf32>
    %c0_1 = arith.constant 0 : index
    %c0_2 = arith.constant 0 : index
    %3 = vector.load %arg1[%c0_1, %c0_2] : memref<320x256xf32, #tpu.memory_space<vmem>>, vector<256x256xf32>
    %cst = arith.constant dense<0.000000e+00> : vector<1x256xf32>
    %4 = tpu.matmul %0, %3, %cst {dimension_numbers = #tpu.dot_dimension_numbers<[1], [0], [0], [1], [0, 0, 1, 1], [], []>} : vector<1x256xf32>, vector<256x256xf32>, vector<1x256xf32> -> vector<1x256xf32>
    %c0_3 = arith.constant 0 : index
    %c0_4 = arith.constant 0 : index
    %5 = vector.load %arg2[%c0_3, %c0_4] : memref<3x256xf32, #tpu.memory_space<vmem>>, vector<1x256xf32>
    %6 = arith.addf %4, %5 : vector<1x256xf32>
    %7 = vector.extract_strided_slice %6 {offsets = [0, 0], sizes = [1, 128], strides = [1, 1]} : vector<1x256xf32> to vector<1x128xf32>
    %8 = vector.extract_strided_slice %6 {offsets = [0, 128], sizes = [1, 128], strides = [1, 1]} : vector<1x256xf32> to vector<1x128xf32>
    %9 = arith.negf %7 : vector<1x128xf32>
    %10 = math.exp %9 : vector<1x128xf32>
    %cst_5 = arith.constant 1.000000e+00 : f32
    %11 = vector.broadcast %cst_5 : f32 to vector<1x128xf32>
    %12 = arith.addf %11, %10 : vector<1x128xf32>
    %13 = arith.divf %11, %12 : vector<1x128xf32>
    %14 = math.tanh %7 : vector<1x128xf32>
    %15 = vector.extract_strided_slice %13 {offsets = [0, 32], sizes = [1, 32], strides = [1, 1]} : vector<1x128xf32> to vector<1x32xf32>
    %16 = arith.mulf %15, %1 : vector<1x32xf32>
    %17 = vector.extract_strided_slice %13 {offsets = [0, 0], sizes = [1, 32], strides = [1, 1]} : vector<1x128xf32> to vector<1x32xf32>
    %18 = vector.extract_strided_slice %14 {offsets = [0, 64], sizes = [1, 32], strides = [1, 1]} : vector<1x128xf32> to vector<1x32xf32>
    %19 = arith.mulf %17, %18 : vector<1x32xf32>
    %20 = arith.addf %16, %19 : vector<1x32xf32>
    %21 = vector.extract_strided_slice %13 {offsets = [0, 96], sizes = [1, 32], strides = [1, 1]} : vector<1x128xf32> to vector<1x32xf32>
    %22 = math.tanh %20 : vector<1x32xf32>
    %23 = arith.mulf %21, %22 : vector<1x32xf32>
    %c256 = arith.constant 256 : index
    %c0_6 = arith.constant 0 : index
    %24 = vector.load %arg1[%c256, %c0_6] : memref<320x256xf32, #tpu.memory_space<vmem>>, vector<32x256xf32>
    %cst_7 = arith.constant dense<0.000000e+00> : vector<1x256xf32>
    %25 = tpu.matmul %23, %24, %cst_7 {dimension_numbers = #tpu.dot_dimension_numbers<[1], [0], [0], [1], [0, 0, 1, 1], [], []>} : vector<1x32xf32>, vector<32x256xf32>, vector<1x256xf32> -> vector<1x256xf32>
    %c1 = arith.constant 1 : index
    %c0_8 = arith.constant 0 : index
    %26 = vector.load %arg2[%c1, %c0_8] : memref<3x256xf32, #tpu.memory_space<vmem>>, vector<1x256xf32>
    %27 = arith.addf %25, %26 : vector<1x256xf32>
    %28 = vector.extract_strided_slice %27 {offsets = [0, 0], sizes = [1, 128], strides = [1, 1]} : vector<1x256xf32> to vector<1x128xf32>
    %29 = arith.addf %8, %28 : vector<1x128xf32>
    %30 = vector.extract_strided_slice %27 {offsets = [0, 128], sizes = [1, 1], strides = [1, 1]} : vector<1x256xf32> to vector<1x1xf32>
    %31 = arith.negf %29 : vector<1x128xf32>
    %32 = math.exp %31 : vector<1x128xf32>
    %cst_9 = arith.constant 1.000000e+00 : f32
    %33 = vector.broadcast %cst_9 : f32 to vector<1x128xf32>
    %34 = arith.addf %33, %32 : vector<1x128xf32>
    %35 = arith.divf %33, %34 : vector<1x128xf32>
    %36 = math.tanh %29 : vector<1x128xf32>
    %37 = vector.extract_strided_slice %35 {offsets = [0, 32], sizes = [1, 32], strides = [1, 1]} : vector<1x128xf32> to vector<1x32xf32>
    %38 = arith.mulf %37, %2 : vector<1x32xf32>
    %39 = vector.extract_strided_slice %35 {offsets = [0, 0], sizes = [1, 32], strides = [1, 1]} : vector<1x128xf32> to vector<1x32xf32>
    %40 = vector.extract_strided_slice %36 {offsets = [0, 64], sizes = [1, 32], strides = [1, 1]} : vector<1x128xf32> to vector<1x32xf32>
    %41 = arith.mulf %39, %40 : vector<1x32xf32>
    %42 = arith.addf %38, %41 : vector<1x32xf32>
    %43 = vector.extract_strided_slice %35 {offsets = [0, 96], sizes = [1, 32], strides = [1, 1]} : vector<1x128xf32> to vector<1x32xf32>
    %44 = math.tanh %42 : vector<1x32xf32>
    %45 = arith.mulf %43, %44 : vector<1x32xf32>
    %c288 = arith.constant 288 : index
    %c0_10 = arith.constant 0 : index
    %46 = vector.load %arg1[%c288, %c0_10] : memref<320x256xf32, #tpu.memory_space<vmem>>, vector<32x256xf32>
    %cst_11 = arith.constant dense<0.000000e+00> : vector<1x256xf32>
    %47 = tpu.matmul %45, %46, %cst_11 {dimension_numbers = #tpu.dot_dimension_numbers<[1], [0], [0], [1], [0, 0, 1, 1], [], []>} : vector<1x32xf32>, vector<32x256xf32>, vector<1x256xf32> -> vector<1x256xf32>
    %c2 = arith.constant 2 : index
    %c0_12 = arith.constant 0 : index
    %48 = vector.load %arg2[%c2, %c0_12] : memref<3x256xf32, #tpu.memory_space<vmem>>, vector<1x256xf32>
    %49 = arith.addf %47, %48 : vector<1x256xf32>
    %50 = vector.extract_strided_slice %49 {offsets = [0, 0], sizes = [1, 64], strides = [1, 1]} : vector<1x256xf32> to vector<1x64xf32>
    %51 = vector.extract_strided_slice %49 {offsets = [0, 64], sizes = [1, 1], strides = [1, 1]} : vector<1x256xf32> to vector<1x1xf32>
    %cst_13 = arith.constant 1.000000e-07 : f32
    %cst_14 = arith.constant 5.000000e-03 : f32
    %52 = vector.broadcast %cst_13 : f32 to vector<1x1xf32>
    %53 = arith.maximumf %52, %51 : vector<1x1xf32>
    %54 = vector.broadcast %cst_14 : f32 to vector<1x1xf32>
    %55 = arith.minimumf %54, %53 : vector<1x1xf32>
    %cst_15 = arith.constant 0.000000e+00 : f32
    %cst_16 = arith.constant 1.000000e+00 : f32
    %56 = vector.broadcast %cst_15 : f32 to vector<1x1xf32>
    %57 = arith.maximumf %56, %30 : vector<1x1xf32>
    %58 = vector.broadcast %cst_16 : f32 to vector<1x1xf32>
    %59 = arith.minimumf %58, %57 : vector<1x1xf32>
    %cst_17 = arith.constant 2.000000e+00 : f32
    %60 = vector.broadcast %cst_17 : f32 to vector<1x1xf32>
    %61 = arith.mulf %60, %59 : vector<1x1xf32>
    %cst_18 = arith.constant 0.000000e+00 : f32
    %cst_19 = arith.constant 1.000000e+00 : f32
    %62 = vector.broadcast %cst_18 : f32 to vector<1x1xf32>
    %63 = arith.maximumf %62, %61 : vector<1x1xf32>
    %64 = vector.broadcast %cst_19 : f32 to vector<1x1xf32>
    %65 = arith.minimumf %64, %63 : vector<1x1xf32>
    %cst_20 = arith.constant 0.000000e+00 : f32
    %66 = vector.broadcast %cst_20 : f32 to vector<1x62xf32>
    %67 = tpu.concatenate %50, %55, %65, %66, %23, %45, %20, %42 in 1 : vector<1x64xf32>, vector<1x1xf32>, vector<1x1xf32>, vector<1x62xf32>, vector<1x32xf32>, vector<1x32xf32>, vector<1x32xf32>, vector<1x32xf32> -> vector<1x256xf32>
    %c0_21 = arith.constant 0 : index
    %c0_22 = arith.constant 0 : index
    %68 = vector.load %arg3[%c0_21, %c0_22] : memref<1x256xf32, #tpu.memory_space<vmem>>, vector<1x256xf32>
    tpu.vector_store %arg3[%c0_21, %c0_22], %67 {strides = array<i32>} : memref<1x256xf32, #tpu.memory_space<vmem>>, vector<1x256xf32>,
    return
  }
}

</mosaic_0001>

<llo_original>
// kernel: squeeze.9
$region0: #{squeeze.9}
  %s0 = inlined_call_operand.vmem [shape: f32[64], index: 0, kind: input, shape index: {}]
  %s1 = inlined_call_operand.hbm [shape: f32[8,8], index: 1, kind: output, shape index: {}]
  $region1: #{squeeze.9} parent=0
    #allocation0 [shape = 'u8[4096]{0}', space=vmem, size = 0x1000, scoped, tag = 'operand span for operand 1']
    #allocation1 [shape = 's32[1]{0}', space=sflag, size = 0x4, scoped, tag = 'scoped memory for squeeze.9']
    #allocation2 [shape = 'u8[4096]{0}', space=vmem, size = 0x1000, scoped, tag = 'scoped mem for input reshape']
    %2 = vsyncpa [#allocation1], 0
    %s4 = ssub.s32 2, 1
    %v5 = vld [vmem:[%s0] sm:%s4]
    %6 = vst [vmem:[#allocation2] sm:%s4] %v5
    %v7 = vld [vmem:[#allocation2] sm:$0x1]
    %vm8 = vcmask 64512
    %9 = vst.msk [vmem:[#allocation0] sm:$0x1] %vm8, %v7
    %v10 = vld [vmem:[#allocation2] sm:$0x1]
    %11 = vrot.lane.b32.xlu0 %v10, 120
    %v12 = vpop.permute.xlu0 %11
    %vm13 = vcmask 64512
    %s14 = scalar_lea.vmem [#allocation0], 1
    %15 = vst.msk [vmem:[%s14] sm:$0x1] %vm13, %v12
    %v16 = vld [vmem:[#allocation2] sm:$0x1]
    %17 = vrot.lane.b32.xlu0 %v16, 112
    %v18 = vpop.permute.xlu0 %17
    %vm19 = vcmask 64512
    %s20 = scalar_lea.vmem [#allocation0], 2
    %21 = vst.msk [vmem:[%s20] sm:$0x1] %vm19, %v18
    %v22 = vld [vmem:[#allocation2] sm:$0x1]
    %23 = vrot.lane.b32.xlu0 %v22, 104
    %v24 = vpop.permute.xlu0 %23
    %vm25 = vcmask 64512
    %s26 = scalar_lea.vmem [#allocation0], 3
    %27 = vst.msk [vmem:[%s26] sm:$0x1] %vm25, %v24
    %v28 = vld [vmem:[#allocation2] sm:$0x1]
    %29 = vrot.lane.b32.xlu0 %v28, 96
    %v30 = vpop.permute.xlu0 %29
    %vm31 = vcmask 64512
    %s32 = scalar_lea.vmem [#allocation0], 4
    %33 = vst.msk [vmem:[%s32] sm:$0x1] %vm31, %v30
    %v34 = vld [vmem:[#allocation2] sm:$0x1]
    %35 = vrot.lane.b32.xlu0 %v34, 88
    %v36 = vpop.permute.xlu0 %35
    %vm37 = vcmask 64512
    %s38 = scalar_lea.vmem [#allocation0], 5
    %39 = vst.msk [vmem:[%s38] sm:$0x1] %vm37, %v36
    %v40 = vld [vmem:[#allocation2] sm:$0x1]
    %41 = vrot.lane.b32.xlu0 %v40, 80
    %v42 = vpop.permute.xlu0 %41
    %vm43 = vcmask 64512
    %s44 = scalar_lea.vmem [#allocation0], 6
    %45 = vst.msk [vmem:[%s44] sm:$0x1] %vm43, %v42
    %v46 = vld [vmem:[#allocation2] sm:$0x1]
    %47 = vrot.lane.b32.xlu0 %v46, 72
    %v48 = vpop.permute.xlu0 %47
    %vm49 = vcmask 64512
    %s50 = scalar_lea.vmem [#allocation0], 7
    %51 = vst.msk [vmem:[%s50] sm:$0x1] %vm49, %v48
    %53 = vsyncadd [#allocation1], 0
    %s55 = sshll.u32 [#allocation0], 4
    %s56 = int_to_ptr.vmem [resolvable:$true] %s55
    %s57 = sshll.u32 %s1, 4
    %s58 = int_to_ptr.hbm [resolvable:$true] %s57
    %60 = dma.vmem_to_hbm [thread:$0]  %s56, 128, %s58, [#allocation1]
    %62 = dma.done [#allocation1], 128
    %63 = vsyncpa [#allocation1], 1

// kernel: lstm_tele_lr_forward.1
$region0: #{lstm_tele_lr_forward.1}
  #allocation0 [shape = 'u32[]', space=smem, size = 0x4, offset = 0x4, fixed_abs, tag = 'smem constant byte address 0x4 - core index']
  #allocation1 [shape = 'u32[72,128]{1,0:T(1,128)}', space=vmem, size = 0x9000, scoped, tag = 'internal scratch']
  %s0 = inlined_call_operand.vmem [shape: f32[1,256], index: 0, kind: input, shape index: {}]
  %s1 = inlined_call_operand.hbm [shape: f32[320,256], index: 1, kind: input, shape index: {}]
  %s2 = inlined_call_operand.vmem [shape: f32[3,256], index: 2, kind: input, shape index: {}]
  %s3 = inlined_call_operand.vmem [shape: f32[1,256], index: 3, kind: output, shape index: {}]
  %s4 = sld [smem:[#allocation0]]
  $region26: #{lstm_tele_lr_forward.1} parent=0
    _
  %s6 = ssub.s32 1, %s4
  %s7 = scalar_select 0, %s6, %s4
  $region1: #{lstm_tele_lr_forward.1} parent=0
    #allocation2 [shape = 'u8[327680]{0}', space=vmem, size = 0x50000, scoped, tag = 'input window, operand 1, single buffered']
    #allocation3 [shape = 's32[1]{0}', space=sflag, size = 0x4, scoped, tag = 'scoped memory for lstm_tele_lr_forward.1']
    %8 = vsyncpa [#allocation3], 0
    // Predicated region
    $region2: #{lstm_tele_lr_forward.1} parent=1 // pred_check
      _
    $region3: #{lstm_tele_lr_forward.1} parent=1 // pred_check_branch
      %10 = sbr.rel (0) target = $region5
    $region4: #{lstm_tele_lr_forward.1} parent=1 // pred_region
      _
    $region5: #{lstm_tele_lr_forward.1} parent=1 // pred_fallthru
      _
    // Predicated region
    $region6: #{lstm_tele_lr_forward.1} parent=1 // pred_check
      _
    $region7: #{lstm_tele_lr_forward.1} parent=1 // pred_check_branch
      %12 = sbr.rel (0) target = $region9
    $region8: #{lstm_tele_lr_forward.1} parent=1 // pred_region
      %14 = vsyncadd [#allocation3], 0
      %s15 = sshll.u32 %s1, 4
      %s16 = int_to_ptr.hbm [resolvable:$true] %s15
      %s17 = sshll.u32 [#allocation2], 4
      %s18 = int_to_ptr.vmem [resolvable:$true] %s17
      %23 = dma.hbm_to_vmem [thread:$0]  %s16, 10240, %s18, [#allocation3], 256, 256, 16
    $region9: #{lstm_tele_lr_forward.1} parent=1 // pred_fallthru
      _
    // Predicated region
    $region10: #{lstm_tele_lr_forward.1} parent=1 // pred_check
      _
    $region11: #{lstm_tele_lr_forward.1} parent=1 // pred_check_branch
      %25 = sbr.rel (0) target = $region13
    $region12: #{lstm_tele_lr_forward.1} parent=1 // pred_region
      _
    $region13: #{lstm_tele_lr_forward.1} parent=1 // pred_fallthru
      _
    // Predicated region
    $region14: #{lstm_tele_lr_forward.1} parent=1 // pred_check
      _
    $region15: #{lstm_tele_lr_forward.1} parent=1 // pred_check_branch
      %27 = sbr.rel (0) target = $region17
    $region16: #{lstm_tele_lr_forward.1} parent=1 // pred_region
      %29 = dma.done [#allocation3], 10240
    $region17: #{lstm_tele_lr_forward.1} parent=1 // pred_fallthru
      _
    %v30 = vld [vmem:[%s0] sm:$0x3]
    %v31 = vld [vmem:[#allocation2] sm:$0xff]
    %v32 = vld [vmem:[#allocation2 + $0x8] sm:$0xff]
    %v33 = vld [vmem:[#allocation2 + $0x10] sm:$0xff]
    %v34 = vld [vmem:[#allocation2 + $0x18] sm:$0xff]
    %v35 = vld [vmem:[#allocation2 + $0x20] sm:$0xff]
    %v36 = vld [vmem:[#allocation2 + $0x28] sm:$0xff]
    %v37 = vld [vmem:[#allocation2 + $0x30] sm:$0xff]
    %v38 = vld [vmem:[#allocation2 + $0x38] sm:$0xff]
    %v39 = vld [vmem:[#allocation2 + $0x40] sm:$0xff]
    %v40 = vld [vmem:[#allocation2 + $0x48] sm:$0xff]
    %v41 = vld [vmem:[#allocation2 + $0x50] sm:$0xff]
    %v42 = vld [vmem:[#allocation2 + $0x58] sm:$0xff]
    %v43 = vld [vmem:[#allocation2 + $0x60] sm:$0xff]
    %v44 = vld [vmem:[#allocation2 + $0x68] sm:$0xff]
    %v45 = vld [vmem:[#allocation2 + $0x70] sm:$0xff]
    %v46 = vld [vmem:[#allocation2 + $0x78] sm:$0xff]
    %v47 = vld [vmem:[#allocation2 + $0x80] sm:$0xff]
    %v48 = vld [vmem:[#allocation2 + $0x88] sm:$0xff]
    %v49 = vld [vmem:[#allocation2 + $0x90] sm:$0xff]
    %v50 = vld [vmem:[#allocation2 + $0x98] sm:$0xff]
    %v51 = vld [vmem:[#allocation2 + $0xa0] sm:$0xff]
    %v52 = vld [vmem:[#allocation2 + $0xa8] sm:$0xff]
    %v53 = vld [vmem:[#allocation2 + $0xb0] sm:$0xff]
    %v54 = vld [vmem:[#allocation2 + $0xb8] sm:$0xff]
    %v55 = vld [vmem:[#allocation2 + $0xc0] sm:$0xff]
    %v56 = vld [vmem:[#allocation2 + $0xc8] sm:$0xff]
    %v57 = vld [vmem:[#allocation2 + $0xd0] sm:$0xff]
    %v58 = vld [vmem:[#allocation2 + $0xd8] sm:$0xff]
    %v59 = vld [vmem:[#allocation2 + $0xe0] sm:$0xff]
    %v60 = vld [vmem:[#allocation2 + $0xe8] sm:$0xff]
    %v61 = vld [vmem:[#allocation2 + $0xf0] sm:$0xff]
    %v62 = vld [vmem:[#allocation2 + $0xf8] sm:$0xff]
    %v63 = vld [vmem:[#allocation2 + $0x100] sm:$0xff]
    %v64 = vld [vmem:[#allocation2 + $0x108] sm:$0xff]
    %v65 = vld [vmem:[#allocation2 + $0x110] sm:$0xff]
    %v66 = vld [vmem:[#allocation2 + $0x118] sm:$0xff]
    %v67 = vld [vmem:[#allocation2 + $0x120] sm:$0xff]
    %v68 = vld [vmem:[#allocation2 + $0x128] sm:$0xff]
    %v69 = vld [vmem:[#allocation2 + $0x130] sm:$0xff]
    %v70 = vld [vmem:[#allocation2 + $0x138] sm:$0xff]
    %v71 = vld [vmem:[#allocation2 + $0x140] sm:$0xff]
    %v72 = vld [vmem:[#allocation2 + $0x148] sm:$0xff]
    %v73 = vld [vmem:[#allocation2 + $0x150] sm:$0xff]
    %v74 = vld [vmem:[#allocation2 + $0x158] sm:$0xff]
    %v75 = vld [vmem:[#allocation2 + $0x160] sm:$0xff]
    %v76 = vld [vmem:[#allocation2 + $0x168] sm:$0xff]
    %v77 = vld [vmem:[#allocation2 + $0x170] sm:$0xff]
    %v78 = vld [vmem:[#allocation2 + $0x178] sm:$0xff]
    %v79 = vld [vmem:[#allocation2 + $0x180] sm:$0xff]
    %v80 = vld [vmem:[#allocation2 + $0x188] sm:$0xff]
    %v81 = vld [vmem:[#allocation2 + $0x190] sm:$0xff]
    %v82 = vld [vmem:[#allocation2 + $0x198] sm:$0xff]
    %v83 = vld [vmem:[#allocation2 + $0x1a0] sm:$0xff]
    %v84 = vld [vmem:[#allocation2 + $0x1a8] sm:$0xff]
    %v85 = vld [vmem:[#allocation2 + $0x1b0] sm:$0xff]
    %v86 = vld [vmem:[#allocation2 + $0x1b8] sm:$0xff]
    %v87 = vld [vmem:[#allocation2 + $0x1c0] sm:$0xff]
    %v88 = vld [vmem:[#allocation2 + $0x1c8] sm:$0xff]
    %v89 = vld [vmem:[#allocation2 + $0x1d0] sm:$0xff]
    %v90 = vld [vmem:[#allocation2 + $0x1d8] sm:$0xff]
    %v91 = vld [vmem:[#allocation2 + $0x1e0] sm:$0xff]
    %v92 = vld [vmem:[#allocation2 + $0x1e8] sm:$0xff]
    %v93 = vld [vmem:[#allocation2 + $0x1f0] sm:$0xff]
    %v94 = vld [vmem:[#allocation2 + $0x1f8] sm:$0xff]
    %v95 = vld [vmem:[%s2] ss:$4 sm:$0x3]
    %v97 = vperm.slane %v30, 0
    %v98 = vperm.slane %v30, 1
    %v102 = vperm.slane %v95, 0
    %v103 = vperm.slane %v95, 1
    %106 = vmatpush.msra.mxu0 %v61
    %107 = vmatpush.msra.mxu0 %v59
    %108 = vmatpush.msra.mxu0 %v57
    %109 = vmatpush.msra.mxu0 %v55
    %110 = vmatpush.msra.mxu0 %v53
    %111 = vmatpush.msra.mxu0 %v51
    %112 = vmatpush.msra.mxu0 %v49
    %113 = vmatpush.msra.mxu0 %v47
    %114 = vmatpush.msra.mxu0 %v45
    %115 = vmatpush.msra.mxu0 %v43
    %116 = vmatpush.msra.mxu0 %v41
    %117 = vmatpush.msra.mxu0 %v39
    %118 = vmatpush.msra.mxu0 %v37
    %119 = vmatpush.msra.mxu0 %v35
    %120 = vmatpush.msra.mxu0 %v33
    %121 = vmatpush.msra.mxu0 %v31
    %122 = vmatmul.f32.gmra.mxu0 %v97
    %v123 = vpop.f32.mrf.mxu0
    %v124 = vadd.f32 %v102, %v123
    %125 = vdwg.mxu0
    %126 = vmatpush.msra.mxu0 %v93
    %127 = vmatpush.msra.mxu0 %v91
    %128 = vmatpush.msra.mxu0 %v89
    %129 = vmatpush.msra.mxu0 %v87
    %130 = vmatpush.msra.mxu0 %v85
    %131 = vmatpush.msra.mxu0 %v83
    %132 = vmatpush.msra.mxu0 %v81
    %133 = vmatpush.msra.mxu0 %v79
    %134 = vmatpush.msra.mxu0 %v77
    %135 = vmatpush.msra.mxu0 %v75
    %136 = vmatpush.msra.mxu0 %v73
    %137 = vmatpush.msra.mxu0 %v71
    %138 = vmatpush.msra.mxu0 %v69
    %139 = vmatpush.msra.mxu0 %v67
    %140 = vmatpush.msra.mxu0 %v65
    %141 = vmatpush.msra.mxu0 %v63
    %142 = vmatmul.f32.gmra.mxu0 %v98
    %v143 = vpop.f32.mrf.mxu0
    %v144 = vadd.f32 %v124, %v143
    %145 = vdwg.mxu0
    %146 = vmatpush.msra.mxu0 %v62
    %147 = vmatpush.msra.mxu0 %v60
    %148 = vmatpush.msra.mxu0 %v58
    %149 = vmatpush.msra.mxu0 %v56
    %150 = vmatpush.msra.mxu0 %v54
    %151 = vmatpush.msra.mxu0 %v52
    %152 = vmatpush.msra.mxu0 %v50
    %153 = vmatpush.msra.mxu0 %v48
    %154 = vmatpush.msra.mxu0 %v46
    %155 = vmatpush.msra.mxu0 %v44
    %156 = vmatpush.msra.mxu0 %v42
    %157 = vmatpush.msra.mxu0 %v40
    %158 = vmatpush.msra.mxu0 %v38
    %159 = vmatpush.msra.mxu0 %v36
    %160 = vmatpush.msra.mxu0 %v34
    %161 = vmatpush.msra.mxu0 %v32
    %162 = vmatmul.f32.gmra.mxu0 %v97
    %v163 = vpop.f32.mrf.mxu0
    %v164 = vadd.f32 %v103, %v163
    %165 = vdwg.mxu0
    %166 = vmatpush.msra.mxu0 %v94
    %167 = vmatpush.msra.mxu0 %v92
    %168 = vmatpush.msra.mxu0 %v90
    %169 = vmatpush.msra.mxu0 %v88
    %170 = vmatpush.msra.mxu0 %v86
    %171 = vmatpush.msra.mxu0 %v84
    %172 = vmatpush.msra.mxu0 %v82
    %173 = vmatpush.msra.mxu0 %v80
    %174 = vmatpush.msra.mxu0 %v78
    %175 = vmatpush.msra.mxu0 %v76
    %176 = vmatpush.msra.mxu0 %v74
    %177 = vmatpush.msra.mxu0 %v72
    %178 = vmatpush.msra.mxu0 %v70
    %179 = vmatpush.msra.mxu0 %v68
    %180 = vmatpush.msra.mxu0 %v66
    %181 = vmatpush.msra.mxu0 %v64
    %182 = vmatmul.f32.gmra.mxu0 %v98
    %v183 = vpop.f32.mrf.mxu0
    %v184 = vadd.f32 %v164, %v183
    %185 = vdwg.mxu0
    %v186 = vxor.u32 %v144, 2147483648
    %v187 = vmul.f32 %v186, 1.442695
    %v188 = vpow.pop %v187
    %v189 = vadd.f32 %v188, 1.0
    %v190 = vrcp.pop %v189
    %v191 = vmul.f32 %v189, %v190
    %v192 = vsub.f32 1.0, %v191
    %v193 = vmul.f32 %v190, %v192
    %v194 = vadd.f32 %v190, %v193
    %vm195 = vweird.f32 %v189
    %vm196 = vweird.f32 %v190
    %vm197 = vmor %vm195, %vm196
    %v198 = vsel %vm197, %v190, %v194
    %v199 = vand.u32 2147483647, %v189
    %vm200 = vcmp.eq.f32.partialorder %v199, 8.507059e+37
    %v201 = vand.u32 %v189, 2147483648
    %v202 = vor.u32 1.1754944e-38, %v201
    %v203 = vsel %vm200, %v202, %v198
    %v204 = vmul.f32 1.0, %v203
    %v205 = vtanh.pop %v144
    %206 = vrot.lane.b32.xlu0 %v98, 32
    %v207 = vpop.permute.xlu0 %206
    %v209 = vmul.f32 %v204, %v207
    %211 = vrot.lane.b32.xlu0 %v205, 64
    %v212 = vpop.permute.xlu0 %211
    %v214 = vmul.f32 %v204, %v212
    %216 = vrot.lane.b32.xlu0 %v214, 32
    %v217 = vpop.permute.xlu0 %216
    %v219 = vadd.f32 %v209, %v217
    %v220 = vtanh.pop %v219
    %222 = vrot.lane.b32.xlu0 %v220, 64
    %v223 = vpop.permute.xlu0 %222
    %v225 = vmul.f32 %v204, %v223
    %v226 = vld [vmem:[#allocation2 + $0x200] sm:$0xff]
    %v227 = vld [vmem:[#allocation2 + $0x208] sm:$0xff]
    %v228 = vld [vmem:[#allocation2 + $0x210] sm:$0xff]
    %v229 = vld [vmem:[#allocation2 + $0x218] sm:$0xff]
    %v230 = vld [vmem:[#allocation2 + $0x220] sm:$0xff]
    %v231 = vld [vmem:[#allocation2 + $0x228] sm:$0xff]
    %v232 = vld [vmem:[#allocation2 + $0x230] sm:$0xff]
    %v233 = vld [vmem:[#allocation2 + $0x238] sm:$0xff]
    %s234 = scalar_lea.vmem %s2, 1
    %v235 = vld [vmem:[%s234] ss:$4 sm:$0x3]
    %237 = vrot.lane.b32.xlu0 %v225, 32
    %v238 = vpop.permute.xlu0 %237
    %v240 = vperm.slane %v235, 0
    %v241 = vperm.slane %v235, 1
    %vm244 = vcmask 261120
    %v245 = vsel %vm244, %v238, 0
    %247 = vmatpush.msra.mxu0 0.0
    %248 = vmatpush.msra.mxu0 0.0
    %249 = vmatpush.msra.mxu0 0.0
    %250 = vmatpush.msra.mxu0 0.0
    %251 = vmatpush.msra.mxu0 0.0
    %252 = vmatpush.msra.mxu0 0.0
    %253 = vmatpush.msra.mxu0 0.0
    %254 = vmatpush.msra.mxu0 0.0
    %255 = vmatpush.msra.mxu0 0.0
    %256 = vmatpush.msra.mxu0 0.0
    %257 = vmatpush.msra.mxu0 0.0
    %258 = vmatpush.msra.mxu0 0.0
    %259 = vmatpush.msra.mxu0 %v232
    %260 = vmatpush.msra.mxu0 %v230
    %261 = vmatpush.msra.mxu0 %v228
    %262 = vmatpush.msra.mxu0 %v226
    %263 = vmatmul.f32.gmra.mxu0 %v245
    %v264 = vpop.f32.mrf.mxu0
    %v265 = vadd.f32 %v240, %v264
    %266 = vdwg.mxu0
    %267 = vmatpush.msra.mxu0 0.0
    %268 = vmatpush.msra.mxu0 0.0
    %269 = vmatpush.msra.mxu0 0.0
    %270 = vmatpush.msra.mxu0 0.0
    %271 = vmatpush.msra.mxu0 0.0
    %272 = vmatpush.msra.mxu0 0.0
    %273 = vmatpush.msra.mxu0 0.0
    %274 = vmatpush.msra.mxu0 0.0
    %275 = vmatpush.msra.mxu0 0.0
    %276 = vmatpush.msra.mxu0 0.0
    %277 = vmatpush.msra.mxu0 0.0
    %278 = vmatpush.msra.mxu0 0.0
    %279 = vmatpush.msra.mxu0 %v233
    %280 = vmatpush.msra.mxu0 %v231
    %281 = vmatpush.msra.mxu0 %v229
    %282 = vmatpush.msra.mxu0 %v227
    %283 = vmatmul.f32.gmra.mxu0 %v245
    %v284 = vpop.f32.mrf.mxu0
    %v285 = vadd.f32 %v241, %v284
    %286 = vdwg.mxu0
    %v287 = vadd.f32 %v184, %v265
    %v288 = vxor.u32 %v287, 2147483648
    %v289 = vmul.f32 %v288, 1.442695
    %v290 = vpow.pop %v289
    %v291 = vadd.f32 %v290, 1.0
    %v292 = vrcp.pop %v291
    %v293 = vmul.f32 %v291, %v292
    %v294 = vsub.f32 1.0, %v293
    %v295 = vmul.f32 %v292, %v294
    %v296 = vadd.f32 %v292, %v295
    %vm297 = vweird.f32 %v291
    %vm298 = vweird.f32 %v292
    %vm299 = vmor %vm297, %vm298
    %v300 = vsel %vm299, %v292, %v296
    %v301 = vand.u32 2147483647, %v291
    %vm302 = vcmp.eq.f32.partialorder %v301, 8.507059e+37
    %v303 = vand.u32 %v291, 2147483648
    %v304 = vor.u32 1.1754944e-38, %v303
    %v305 = vsel %vm302, %v304, %v300
    %v306 = vmul.f32 1.0, %v305
    %v307 = vtanh.pop %v287
    %v308 = vmul.f32 %v306, %v98
    %310 = vrot.lane.b32.xlu0 %v307, 64
    %v311 = vpop.permute.xlu0 %310
    %v313 = vmul.f32 %v306, %v311
    %315 = vrot.lane.b32.xlu0 %v313, 32
    %v316 = vpop.permute.xlu0 %315
    %v318 = vadd.f32 %v308, %v316
    %v319 = vtanh.pop %v318
    %321 = vrot.lane.b32.xlu0 %v319, 64
    %v322 = vpop.permute.xlu0 %321
    %v324 = vmul.f32 %v306, %v322
    %v325 = vld [vmem:[#allocation2 + $0x240] sm:$0xff]
    %v326 = vld [vmem:[#allocation2 + $0x250] sm:$0xff]
    %v327 = vld [vmem:[#allocation2 + $0x260] sm:$0xff]
    %v328 = vld [vmem:[#allocation2 + $0x270] sm:$0xff]
    %s329 = scalar_lea.vmem %s2, 2
    %v330 = vld [vmem:[%s329] ss:$4 sm:$0x3]
    %332 = vrot.lane.b32.xlu0 %v324, 32
    %v333 = vpop.permute.xlu0 %332
    %v335 = vperm.slane %v330, 0
    %v337 = vsel %vm244, %v333, 0
    %339 = vmatpush.msra.mxu0 0.0
    %340 = vmatpush.msra.mxu0 0.0
    %341 = vmatpush.msra.mxu0 0.0
    %342 = vmatpush.msra.mxu0 0.0
    %343 = vmatpush.msra.mxu0 0.0
    %344 = vmatpush.msra.mxu0 0.0
    %345 = vmatpush.msra.mxu0 0.0
    %346 = vmatpush.msra.mxu0 0.0
    %347 = vmatpush.msra.mxu0 0.0
    %348 = vmatpush.msra.mxu0 0.0
    %349 = vmatpush.msra.mxu0 0.0
    %350 = vmatpush.msra.mxu0 0.0
    %351 = vmatpush.msra.mxu0 %v328
    %352 = vmatpush.msra.mxu0 %v327
    %353 = vmatpush.msra.mxu0 %v326
    %354 = vmatpush.msra.mxu0 %v325
    %355 = vmatmul.f32.gmra.mxu0 %v337
    %v356 = vpop.f32.mrf.mxu0
    %v357 = vadd.f32 %v335, %v356
    %358 = vdwg.mxu0
    %v359 = vmax.f32 %v357, 1e-07
    %v360 = vmin.f32 %v359, 0.005
    %v361 = vmax.f32 %v285, 0.0
    %v362 = vmin.f32 %v361, 1.0
    %v363 = vmul.f32 %v362, 2.0
    %v364 = vmax.f32 %v363, 0.0
    %v365 = vmin.f32 %v364, 1.0
    %367 = vrot.lane.b32.xlu0 %v365, 65
    %v368 = vpop.permute.xlu0 %367
    %371 = vrot.lane.b32.xlu0 %v324, 64
    %v372 = vpop.permute.xlu0 %371
    %375 = vrot.lane.b32.xlu0 %v219, 32
    %v376 = vpop.permute.xlu0 %375
    %379 = vrot.lane.b32.xlu0 %v318, 64
    %v380 = vpop.permute.xlu0 %379
    %vm382 = vcmask 523264
    %v383 = vsel %vm382, %v357, %v360
    %vm384 = vcmask 531456
    %v385 = vsel %vm384, %v383, %v368
    %vm386 = vcmask 539648
    %v387 = vsel %vm386, %v385, 0.0
    %v388 = vsel %vm244, %v238, %v372
    %v389 = vsel %vm382, %v388, %v376
    %vm390 = vcmask 785408
    %v391 = vsel %vm390, %v389, %v380
    %v394 = vrot.slane %v391, 7
    %vm395 = vcmask 1040384
    %v396 = vsel %vm395, %v387, %v394
    %v398 = vlaneseq
    %vm399 = vcmp.ge.s32.totalorder %v398, 0
    %vm400 = vcmp.lt.s32.totalorder %v398, 256
    %vm401 = vmand %vm399, %vm400
    %402 = vst.msk [vmem:[%s3] sm:$0x3] %vm401, %v396
    // Predicated region
    $region18: #{lstm_tele_lr_forward.1} parent=1 // pred_check
      _
    $region19: #{lstm_tele_lr_forward.1} parent=1 // pred_check_branch
      %404 = sbr.rel (0) target = $region21
    $region20: #{lstm_tele_lr_forward.1} parent=1 // pred_region
      _
    $region21: #{lstm_tele_lr_forward.1} parent=1 // pred_fallthru
      _
    // Predicated region
    $region22: #{lstm_tele_lr_forward.1} parent=1 // pred_check
      _
    $region23: #{lstm_tele_lr_forward.1} parent=1 // pred_check_branch
      %406 = sbr.rel (0) target = $region25
    $region24: #{lstm_tele_lr_forward.1} parent=1 // pred_region
      _
    $region25: #{lstm_tele_lr_forward.1} parent=1 // pred_fallthru
      _
    %407 = vsyncpa [#allocation3], 1

</llo_original>
